<compile_context>
chip_gen: v7x
topology: tpu7x:2x2x1
jax: 0.10.0
libtpu: 0.0.40
codegen_flags: <defaults>
</compile_context>

<pallas_src>
import functools

import jax
import jax.numpy as jnp
from jax.experimental import pallas as pl
from jax.experimental.pallas import tpu as pltpu

_LANE = 128
_SUBLANE = 8


def _smooth_ce_kernel_lane_rows(logits_ref, label_ref, out_ref, *, eps, way, n_rows):
    """Small-C path: logits tile is [C, bn] (classes on sublanes, rows on lanes)."""
    i = pl.program_id(0)
    logits = logits_ref[...].astype(jnp.float32)          # [C, bn] f32 compute
    labels = label_ref[...]                               # [1, bn] int32
    c, bn = logits.shape

    base = eps / (way - 1)                                 # off-class weight
    on = 1.0 - eps                                         # true-class weight
    sum_smooth = (c - 1) * base + on                       # trace-time constant

    # Numerically stable log-softmax pieces; class axis = sublanes (axis 0).
    m = jnp.max(logits, axis=0, keepdims=True)             # [1, bn]
    shifted = logits - m
    lse = jnp.log(jnp.sum(jnp.exp(shifted), axis=0, keepdims=True))  # [1, bn]

    cls_idx = jax.lax.broadcasted_iota(jnp.int32, (c, bn), 0)
    w = jnp.where(cls_idx == labels, on, base)              # smoothing weights
    weighted = jnp.sum(w * shifted, axis=0, keepdims=True)  # [1, bn]

    # -sum_c(smooth * log_prb) = sum_c(smooth)*lse - sum_c(smooth*shifted)
    per_row = sum_smooth * lse - weighted                   # [1, bn]

    # Mask rows past the true batch size (padded lanes of the last block).
    row_ids = i * bn + jax.lax.broadcasted_iota(jnp.int32, (1, bn), 1)
    per_row = jnp.where(row_ids < n_rows, per_row, 0.0)

    out_ref[...] = jnp.broadcast_to(jnp.sum(per_row), (1, 1, _LANE)).astype(jnp.float32)


def _smooth_ce_kernel_sublane_rows(logits_ref, label_ref, out_ref, *, eps, way, n_rows):
    """Large-C path: logits tile is [bn, C] (rows on sublanes, classes on lanes)."""
    i = pl.program_id(0)
    logits = logits_ref[...].astype(jnp.float32)          # [bn, C] f32 compute
    labels = label_ref[...]                               # [bn, 1] int32
    bn, c = logits.shape

    base = eps / (way - 1)
    on = 1.0 - eps
    sum_smooth = (c - 1) * base + on

    m = jnp.max(logits, axis=1, keepdims=True)             # [bn, 1]
    shifted = logits - m
    lse = jnp.log(jnp.sum(jnp.exp(shifted), axis=1, keepdims=True))

    cls_idx = jax.lax.broadcasted_iota(jnp.int32, (bn, c), 1)
    w = jnp.where(cls_idx == labels, on, base)
    weighted = jnp.sum(w * shifted, axis=1, keepdims=True)  # [bn, 1]

    per_row = sum_smooth * lse - weighted                   # [bn, 1]

    row_ids = i * bn + jax.lax.broadcasted_iota(jnp.int32, (bn, 1), 0)
    per_row = jnp.where(row_ids < n_rows, per_row, 0.0)

    out_ref[...] = jnp.broadcast_to(jnp.sum(per_row), (1, 1, _LANE)).astype(jnp.float32)


def _round_down(x, m):
    return max(m, (x // m) * m)


def _pick_block(n, c, itemsize, transposed, block_rows=None):
    """VMEM-budgeted row-block size + explicit scoped-VMEM limit (with headroom)."""
    if transposed:
        align = _LANE                                       # rows live on lanes
        c_pad = max(_SUBLANE, -(-c // _SUBLANE) * _SUBLANE)  # classes pad to 8 sublanes
        label_row_bytes = _SUBLANE * 4                       # (1, bn) i32 pads to 8 sublanes
        cap = 32768
    else:
        align = _SUBLANE                                     # rows live on sublanes
        c_pad = -(-c // _LANE) * _LANE                       # classes pad to 128 lanes
        label_row_bytes = _LANE * 4                          # (bn, 1) i32 pads to 128 lanes
        cap = 8192
    # Per-row VMEM: double-buffered logits tile + ~4 f32 (c, bn) intermediates
    # (astype/shifted/exp/weights) + double-buffered padded label tile.
    per_row = c_pad * (2 * itemsize + 4 * 4) + 2 * label_row_bytes
    budget = 8 * 1024 * 1024                                 # working-set target
    if block_rows is None:
        bn = min(cap, _round_down(budget // per_row, align))
    else:
        bn = _round_down(int(block_rows), align)
    if n <= bn:
        bn = n                                               # single full-extent block
    working = bn * per_row + (1 << 16)
    vmem_limit = int(min(32 * 1024 * 1024, max(16 * 1024 * 1024, 2 * working)))
    return bn, vmem_limit


def smooth_ce_loss(results, label, eps=0.1, way=5, block_rows=None):
    """results: [N, C] float (f32/bf16), label: [N] int -> scalar f32 loss."""
    if way < 2:
        raise ValueError("way must be >= 2 for label smoothing (eps / (way - 1)).")

    n, c = results.shape
    itemsize = jnp.dtype(results.dtype).itemsize
    transposed = c <= 64                                     # small-C: rows on lanes

    bn, vmem_limit = _pick_block(n, c, itemsize, transposed, block_rows)
    num_blocks = -(-n // bn)

    if transposed:
        x = results.T                                        # [C, N] (cheap at small C)
        labels2d = label.reshape(1, n).astype(jnp.int32)
        kernel = functools.partial(
            _smooth_ce_kernel_lane_rows, eps=float(eps), way=int(way), n_rows=n)
        in_specs = [
            pl.BlockSpec((c, bn), lambda i: (0, i)),
            pl.BlockSpec((1, bn), lambda i: (0, i)),
        ]
    else:
        x = results                                          # [N, C]
        labels2d = label.reshape(n, 1).astype(jnp.int32)
        kernel = functools.partial(
            _smooth_ce_kernel_sublane_rows, eps=float(eps), way=int(way), n_rows=n)
        in_specs = [
            pl.BlockSpec((bn, c), lambda i: (i, 0)),
            pl.BlockSpec((bn, 1), lambda i: (i, 0)),
        ]

    partials = pl.pallas_call(
        kernel,
        out_shape=jax.ShapeDtypeStruct((num_blocks, 1, _LANE), jnp.float32),
        grid_spec=pltpu.PrefetchScalarGridSpec(
            num_scalar_prefetch=0,
            grid=(num_blocks,),
            in_specs=in_specs,
            out_specs=pl.BlockSpec((1, 1, _LANE), lambda i: (i, 0, 0)),
        ),
        compiler_params=pltpu.CompilerParams(
            dimension_semantics=("parallel",),               # independent row blocks
            vmem_limit_bytes=vmem_limit,
        ),
    )(x, labels2d)

    # Final tiny reduction over per-block partials; 1/N applied once here.
    return jnp.sum(partials[:, 0, 0]) * (1.0 / n)


def _reference(results, label, eps=0.1, way=5):
    n, c = results.shape
    one_hot = jax.nn.one_hot(label, c, dtype=jnp.float32)
    smooth = one_hot * (1.0 - eps) + (1.0 - one_hot) * (eps / (way - 1))
    log_prb = jax.nn.log_softmax(results.astype(jnp.float32), axis=1)
    return jnp.mean(-jnp.sum(smooth * log_prb, axis=1))


if __name__ == "__main__":
    key = jax.random.PRNGKey(0)
    k1, k2, k3, k4, k5 = jax.random.split(key, 5)

    # 1) Few-shot case implied by the module: way=5 classes, small batch.
    way = 5
    n = 8
    results = jax.random.normal(k1, (n, way), dtype=jnp.float32)
    label = jax.random.randint(k2, (n,), 0, way, dtype=jnp.int32)
    loss = smooth_ce_loss(results, label, eps=0.1, way=way)
    jax.block_until_ready(loss)
    ref = _reference(results, label, eps=0.1, way=way)
    assert jnp.allclose(loss, ref, atol=1e-5, rtol=1e-5), (loss, ref)

    # 2) Small-C path with multiple row blocks + remainder masking
    #    (block_rows override keeps the test small; N=1000 not a multiple of 256).
    n2 = 1000
    results2 = jax.random.normal(k3, (n2, way), dtype=jnp.float32)
    label2 = jax.random.randint(k2, (n2,), 0, way, dtype=jnp.int32)
    loss2 = smooth_ce_loss(results2, label2, eps=0.1, way=way, block_rows=256)
    jax.block_until_ready(loss2)
    ref2 = _reference(results2, label2, eps=0.1, way=way)
    assert jnp.allclose(loss2, ref2, atol=1e-5, rtol=1e-5), (loss2, ref2)

    # 3) Large-C path (row-major layout) with a partial last block.
    c3, n3 = 200, 100
    results3 = jax.random.normal(k4, (n3, c3), dtype=jnp.float32)
    label3 = jax.random.randint(k5, (n3,), 0, c3, dtype=jnp.int32)
    loss3 = smooth_ce_loss(results3, label3, eps=0.1, way=c3, block_rows=32)
    jax.block_until_ready(loss3)
    ref3 = _reference(results3, label3, eps=0.1, way=c3)
    assert jnp.allclose(loss3, ref3, atol=1e-5, rtol=1e-5), (loss3, ref3)

    print("KERNEL_OK")
</pallas_src>

<mosaic_0001>
module attributes {stable_mosaic.version = 11 : i64} {
  func.func @_smooth_ce_kernel_lane_rows(%arg0: i32, %arg1: memref<5x8xf32, #tpu.memory_space<vmem>>, %arg2: memref<1x8xi32, #tpu.memory_space<vmem>>, %arg3: memref<1x1x128xf32, #tpu.memory_space<vmem>>) attributes {dimension_semantics = [#tpu.dimension_semantics<parallel>], iteration_bounds = array<i64: 1>, scalar_prefetch = 0 : i64, scratch_operands = 0 : i64, tpu.core_type = #tpu.core_type<tc>, window_params = [{transform_indices = @transform_0, window_bounds = array<i64: 5, 8>}, {transform_indices = @transform_1, window_bounds = array<i64: 1, 8>}, {transform_indices = @transform_2, window_bounds = array<i64: 1, 1, 128>}]} {
    %c0 = arith.constant 0 : index
    %c0_0 = arith.constant 0 : index
    %0 = vector.load %arg1[%c0, %c0_0] : memref<5x8xf32, #tpu.memory_space<vmem>>, vector<5x8xf32>
    %c0_1 = arith.constant 0 : index
    %c0_2 = arith.constant 0 : index
    %1 = vector.load %arg2[%c0_1, %c0_2] : memref<1x8xi32, #tpu.memory_space<vmem>>, vector<1x8xi32>
    %cst = arith.constant dense<0xFF800000> : vector<8xf32>
    %2 = vector.multi_reduction <maximumf>, %0, %cst [0] : vector<5x8xf32> to vector<8xf32>
    %3 = vector.shape_cast %2 : vector<8xf32> to vector<1x8xf32>
    %4 = vector.broadcast %3 : vector<1x8xf32> to vector<5x8xf32>
    %5 = arith.subf %0, %4 : vector<5x8xf32>
    %6 = math.exp %5 : vector<5x8xf32>
    %cst_3 = arith.constant dense<0.000000e+00> : vector<8xf32>
    %7 = vector.multi_reduction <add>, %6, %cst_3 [0] : vector<5x8xf32> to vector<8xf32>
    %8 = vector.shape_cast %7 : vector<8xf32> to vector<1x8xf32>
    %9 = math.log %8 : vector<1x8xf32>
    %10 = tpu.iota {dimensions = array<i32: 0>} : vector<5x8xi32>
    %11 = vector.broadcast %1 : vector<1x8xi32> to vector<5x8xi32>
    %12 = arith.cmpi eq, %10, %11 : vector<5x8xi32>
    %cst_4 = arith.constant 0.899999976 : f32
    %cst_5 = arith.constant 2.500000e-02 : f32
    %13 = vector.broadcast %cst_4 : f32 to vector<5x8xf32>
    %14 = vector.broadcast %cst_5 : f32 to vector<5x8xf32>
    %15 = arith.select %12, %13, %14 : vector<5x8xi1>, vector<5x8xf32>
    %16 = arith.mulf %15, %5 : vector<5x8xf32>
    %cst_6 = arith.constant dense<0.000000e+00> : vector<8xf32>
    %17 = vector.multi_reduction <add>, %16, %cst_6 [0] : vector<5x8xf32> to vector<8xf32>
    %18 = vector.shape_cast %17 : vector<8xf32> to vector<1x8xf32>
    %cst_7 = arith.constant 1.000000e+00 : f32
    %19 = vector.broadcast %cst_7 : f32 to vector<1x8xf32>
    %20 = arith.mulf %19, %9 : vector<1x8xf32>
    %21 = arith.subf %20, %18 : vector<1x8xf32>
    %c8_i32 = arith.constant 8 : i32
    %22 = arith.muli %arg0, %c8_i32 : i32
    %23 = tpu.iota {dimensions = array<i32: 1>} : vector<1x8xi32>
    %24 = vector.broadcast %22 : i32 to vector<1x8xi32>
    %25 = arith.addi %24, %23 : vector<1x8xi32>
    %c8_i32_8 = arith.constant 8 : i32
    %26 = vector.broadcast %c8_i32_8 : i32 to vector<1x8xi32>
    %27 = arith.cmpi slt, %25, %26 : vector<1x8xi32>
    %cst_9 = arith.constant 0.000000e+00 : f32
    %28 = vector.broadcast %cst_9 : f32 to vector<1x8xf32>
    %29 = arith.select %27, %21, %28 : vector<1x8xi1>, vector<1x8xf32>
    %30 = vector.shape_cast %29 : vector<1x8xf32> to vector<1x1x8xf32>
    %cst_10 = arith.constant dense<0.000000e+00> : vector<1xf32>
    %31 = vector.multi_reduction <add>, %30, %cst_10 [1, 2] : vector<1x1x8xf32> to vector<1xf32>
    %32 = vector.shape_cast %31 : vector<1xf32> to vector<1x1x1xf32>
    %33 = vector.extract %32[0, 0, 0] : f32 from vector<1x1x1xf32>
    %34 = vector.broadcast %33 : f32 to vector<1x1x128xf32>
    %c0_11 = arith.constant 0 : index
    %c0_12 = arith.constant 0 : index
    %c0_13 = arith.constant 0 : index
    %35 = vector.load %arg3[%c0_11, %c0_12, %c0_13] : memref<1x1x128xf32, #tpu.memory_space<vmem>>, vector<1x1x128xf32>
    tpu.vector_store %arg3[%c0_11, %c0_12, %c0_13], %34 {strides = array<i32>} : memref<1x1x128xf32, #tpu.memory_space<vmem>>, vector<1x1x128xf32>,
    return
  }
  func.func @transform_0(%arg0: i32) -> (i32, i32) {
    %c0_i32 = arith.constant 0 : i32
    %c0_i32_0 = arith.constant 0 : i32
    return %c0_i32, %arg0 : i32, i32
  }
  func.func @transform_1(%arg0: i32) -> (i32, i32) {
    %c0_i32 = arith.constant 0 : i32
    %c0_i32_0 = arith.constant 0 : i32
    return %c0_i32, %arg0 : i32, i32
  }
  func.func @transform_2(%arg0: i32) -> (i32, i32, i32) {
    %c0_i32 = arith.constant 0 : i32
    %c0_i32_0 = arith.constant 0 : i32
    %c0_i32_1 = arith.constant 0 : i32
    return %arg0, %c0_i32, %c0_i32_0 : i32, i32, i32
  }
}

</mosaic_0001>

<llo_original>
// kernel: tpu_custom_call.1
$region0: #{tpu_custom_call.1}
  #allocation0 [shape = 'u32[]', space=smem, size = 0x4, offset = 0x4, fixed_abs, tag = 'smem constant byte address 0x4 - core index']
  #allocation1 [shape = 'u32[144,128]{1,0:T(1,128)}', space=vmem, size = 0x12000, scoped, tag = 'internal scratch']
  %s0 = inlined_call_operand.hbm [shape: f32[5,8], index: 0, kind: input, shape index: {}]
  %s1 = inlined_call_operand.vmem [shape: s32[1,8], index: 1, kind: input, shape index: {}]
  %s2 = inlined_call_operand.hbm [shape: f32[1,1,128], index: 2, kind: output, shape index: {}]
  %s3 = sld [smem:[#allocation0]]
  $region22: #{tpu_custom_call.1} parent=0
    _
  %s5 = ssub.s32 1, %s3
  %s6 = scalar_select 0, %s5, %s3
  $region1: #{tpu_custom_call.1} parent=0
    #allocation2 [shape = 'u8[4096]{0}', space=vmem, size = 0x1000, scoped, tag = 'input window, operand 0, single buffered']
    #allocation3 [shape = 's32[1]{0}', space=sflag, size = 0x4, scoped, tag = 'scoped memory for tpu_custom_call.1']
    #allocation4 [shape = 's32[1]{0}', space=sflag, size = 0x4, scoped, tag = 'scoped memory for tpu_custom_call.1']
    #allocation5 [shape = 'u8[512]{0}', space=vmem, size = 0x400, scoped, tag = 'output window, operand 0, single buffered']
    %7 = vsyncpa [#allocation3], 0
    %8 = vsyncpa [#allocation4], 0
    // Predicated region
    $region2: #{tpu_custom_call.1} parent=1 // pred_check
      _
    $region3: #{tpu_custom_call.1} parent=1 // pred_check_branch
      %10 = sbr.rel (0) target = $region5
    $region4: #{tpu_custom_call.1} parent=1 // pred_region
      %s12 = ssub.s32 128, 128
      %13 = vsyncadd [#allocation3], %s12
      %s15 = sshll.u32 [#allocation2], 4
      %s16 = int_to_ptr.vmem [resolvable:$true] %s15
      %18 = dma.hbm_to_vmem [thread:$0]  %s0, 128, %s16, [#allocation3]
    $region5: #{tpu_custom_call.1} parent=1 // pred_fallthru
      _
    // Predicated region
    $region6: #{tpu_custom_call.1} parent=1 // pred_check
      _
    $region7: #{tpu_custom_call.1} parent=1 // pred_check_branch
      %20 = sbr.rel (0) target = $region9
    $region8: #{tpu_custom_call.1} parent=1 // pred_region
      _
    $region9: #{tpu_custom_call.1} parent=1 // pred_fallthru
      _
    // Predicated region
    $region10: #{tpu_custom_call.1} parent=1 // pred_check
      _
    $region11: #{tpu_custom_call.1} parent=1 // pred_check_branch
      %22 = sbr.rel (0) target = $region13
    $region12: #{tpu_custom_call.1} parent=1 // pred_region
      %23 = dma.done [#allocation3], 128
    $region13: #{tpu_custom_call.1} parent=1 // pred_fallthru
      _
    %v24 = vld [vmem:[#allocation2] sm:$0x1f]
    %v25 = vld [vmem:[%s1] sm:$0x1]
    %vm26 = vcmask 61440
    %v27 = vsel %vm26, %v24, -inf
    %v28 = vrot.slane %v27, 4
    %v29 = vmax.f32 %v27, %v28
    %v30 = vrot.slane %v29, 2
    %v31 = vmax.f32 %v29, %v30
    %v32 = vrot.slane %v31, 1
    %v33 = vmax.f32 %v31, %v32
    %v34 = vsub.f32 %v24, %v33
    %v35 = vmul.f32 %v34, 1.442695
    %v36 = vpow.pop %v35
    %v37 = vsel %vm26, %v36, 0.0
    %v38 = vrot.slane %v37, 4
    %v39 = vadd.f32 %v37, %v38
    %v40 = vrot.slane %v39, 2
    %v41 = vadd.f32 %v39, %v40
    %v42 = vrot.slane %v41, 1
    %v43 = vadd.f32 %v41, %v42
    %v44 = vlog2.pop %v43
    %v45 = vmul.f32 %v44, 0.6931472
    %v46 = vlaneseq
    %v47 = vshrl.u32 %v46, 7
    %v48 = vlaneseq
    %v49 = vshrl.u32 %v48, 7
    %v50 = vsub.s32 0, %v49
    %v51 = vrot.slane %v25, %v50
    %vm52 = vcmp.eq.s32.totalorder %v47, %v51
    %v53 = vsel %vm52, 0.9, 0.025
    %v54 = vmul.f32 %v53, %v34
    %v55 = vsel %vm26, %v54, 0.0
    %v56 = vrot.slane %v55, 4
    %v57 = vadd.f32 %v55, %v56
    %v58 = vrot.slane %v57, 2
    %v59 = vadd.f32 %v57, %v58
    %v60 = vrot.slane %v59, 1
    %v61 = vadd.f32 %v59, %v60
    %v62 = vsub.f32 %v45, %v61
    %s63 = smul.u32 0, 8
    %v64 = vlaneseq
    %v65 = vand.u32 %v64, 127
    %v66 = vstv %s63
    %v67 = vadd.s32 %v66, %v65
    %vm68 = vcmp.lt.s32.totalorder %v67, 8
    %v69 = vsel %vm68, %v62, 0.0
    %vm70 = vcmask 57344
    %v71 = vsel %vm70, %v69, 0.0
    %72 = vadd.xlane.f32.xlu0 %v71
    %v73 = vpop.xlane.xlu0 %72
    %v74 = vrot.slane %v73, 4
    %v75 = vadd.f32 %v73, %v74
    %v76 = vrot.slane %v75, 2
    %v77 = vadd.f32 %v75, %v76
    %v78 = vrot.slane %v77, 1
    %v79 = vadd.f32 %v77, %v78
    %s80 = vtos %v79
    %v81 = vstv %s80
    %82 = vst [vmem:[#allocation5] sm:$0x1] %v81
    // Predicated region
    $region14: #{tpu_custom_call.1} parent=1 // pred_check
      _
    $region15: #{tpu_custom_call.1} parent=1 // pred_check_branch
      %84 = sbr.rel (0) target = $region17
    $region16: #{tpu_custom_call.1} parent=1 // pred_region
      %s86 = ssub.s32 16, 16
      %87 = vsyncadd [#allocation4], %s86
      %s89 = sshll.u32 [#allocation5], 4
      %s90 = int_to_ptr.vmem [resolvable:$true] %s89
      %92 = dma.vmem_to_hbm [thread:$0]  %s90, 16, %s2, [#allocation4]
    $region17: #{tpu_custom_call.1} parent=1 // pred_fallthru
      _
    // Predicated region
    $region18: #{tpu_custom_call.1} parent=1 // pred_check
      _
    $region19: #{tpu_custom_call.1} parent=1 // pred_check_branch
      %94 = sbr.rel (0) target = $region21
    $region20: #{tpu_custom_call.1} parent=1 // pred_region
      %95 = dma.done [#allocation4], 16
    $region21: #{tpu_custom_call.1} parent=1 // pred_fallthru
      _
    %96 = vsyncpa [#allocation3], 1
    %97 = vsyncpa [#allocation4], 1

</llo_original>
